<compile_context>
chip_gen: v6e
topology: v6e:2x2x1
jax: 0.10.0
libtpu: 0.0.40
codegen_flags: <defaults>
</compile_context>

<pallas_src>
import functools

import jax
import jax.numpy as jnp
from jax.experimental import pallas as pl
from jax.experimental.pallas import tpu as pltpu


def _round_up(x: int, m: int) -> int:
    return ((x + m - 1) // m) * m


# --------------------------------------------------------------------------
# Pass 1: fused (all heads at once) Q/K/V projections, scale folded into Q.
# Grid = (batch, q_tile). Weights are (d_in, H*dhp) bf16 slabs.
# --------------------------------------------------------------------------
def _qkv_proj_kernel(x_ref, wq_ref, wk_ref, wv_ref, q_ref, k_ref, v_ref, *, scale):
    x = x_ref[...].astype(jnp.bfloat16)          # (blk, d_in)
    q = jnp.dot(x, wq_ref[...], preferred_element_type=jnp.float32) * scale
    k = jnp.dot(x, wk_ref[...], preferred_element_type=jnp.float32)
    v = jnp.dot(x, wv_ref[...], preferred_element_type=jnp.float32)
    q_ref[...] = q.astype(q_ref.dtype)           # bf16 store
    k_ref[...] = k.astype(k_ref.dtype)
    v_ref[...] = v.astype(v_ref.dtype)


# --------------------------------------------------------------------------
# Pass 2: flash-style causal attention. Grid = (batch, head, q_tile).
# K/V for the whole (b, h) are VMEM-resident; the kv sweep is an in-kernel
# loop over the <= diagonal tiles only (online softmax, f32 state).
# --------------------------------------------------------------------------
def _flash_causal_kernel(q_ref, k_ref, v_ref, o_ref, *, blk):
    qi = pl.program_id(2)
    q = q_ref[...]                               # (blk, dhp) bf16, pre-scaled
    dhp = q.shape[-1]

    def attend(k, v, m_prev, l_prev, acc_prev, apply_mask):
        # QK^T: contract last dims on the MXU, no explicit transpose.
        s = jax.lax.dot_general(q, k, (((1,), (1,)), ((), ())),
                                preferred_element_type=jnp.float32)  # (blk, blk)
        if apply_mask:
            row = jax.lax.broadcasted_iota(jnp.int32, s.shape, 0)
            col = jax.lax.broadcasted_iota(jnp.int32, s.shape, 1)
            s = jnp.where(col > row, -jnp.inf, s)
        m_new = jnp.maximum(m_prev, jnp.max(s, axis=-1, keepdims=True))
        alpha = jnp.exp(m_prev - m_new)
        p = jnp.exp(s - m_new)
        l_new = alpha * l_prev + jnp.sum(p, axis=-1, keepdims=True)
        acc_new = alpha * acc_prev + jax.lax.dot_general(
            p.astype(v.dtype), v, (((1,), (0,)), ((), ())),
            preferred_element_type=jnp.float32)
        return m_new, l_new, acc_new

    def kv_step(j, carry):
        m, l, acc = carry
        off = pl.multiple_of(j * blk, blk)
        k = k_ref[pl.ds(off, blk), :]
        v = v_ref[pl.ds(off, blk), :]
        return attend(k, v, m, l, acc, apply_mask=False)

    m0 = jnp.full((blk, 1), -jnp.inf, dtype=jnp.float32)
    l0 = jnp.zeros((blk, 1), dtype=jnp.float32)
    acc0 = jnp.zeros((blk, dhp), dtype=jnp.float32)

    # Strictly-below-diagonal kv tiles: no masking work.
    m, l, acc = jax.lax.fori_loop(0, qi, kv_step, (m0, l0, acc0))

    # Diagonal tile: triangular mask. The diagonal element of every row is
    # always unmasked (padded rows have q=0 -> finite score 0), so the
    # exp(m_prev - m_new) update can never see (-inf) - (-inf).
    off = pl.multiple_of(qi * blk, blk)
    m, l, acc = attend(k_ref[pl.ds(off, blk), :], v_ref[pl.ds(off, blk), :],
                       m, l, acc, apply_mask=True)

    o_ref[...] = (acc * pl.reciprocal(l, approx=True)).astype(o_ref.dtype)


# --------------------------------------------------------------------------
# Wrapper: MultiHeadAttnWrapper.forward
# --------------------------------------------------------------------------
def multi_head_attn_wrapper(x, w_query, w_key, w_value, *, block: int = 256):
    """x: (b, T, d_in); w_*: (H, d_in, d_head) per-head nn.Linear weights
    (stored transposed, qkv_bias=False). Returns (b, T, H * d_head)."""
    b, T, d_in = x.shape
    H, _, d_head = w_query.shape
    scale = 1.0 / float(d_head) ** 0.5           # scale from the ORIGINAL head dim

    blk = min(block, _round_up(T, 8))            # 8-aligned q/kv tile
    T_pad = _round_up(T, blk)
    dhp = _round_up(d_head, 128)                 # lane-dense per-head slab
    nq = T_pad // blk
    Hd = H * dhp

    x_p = jnp.pad(x, ((0, 0), (0, T_pad - T), (0, 0))) if T_pad != T else x

    def _slab(w):                                # (H, d_in, d_head) -> (d_in, H*dhp)
        if dhp != d_head:
            w = jnp.pad(w, ((0, 0), (0, 0), (0, dhp - d_head)))
        return jnp.transpose(w, (1, 0, 2)).reshape(d_in, Hd).astype(jnp.bfloat16)

    wq_s, wk_s, wv_s = _slab(w_query), _slab(w_key), _slab(w_value)

    # ---------------- Pass 1: fused QKV projection (bf16 outputs) ----------
    qkv_shape = jax.ShapeDtypeStruct((b, T_pad, Hd), jnp.bfloat16)
    qkv_spec = pl.BlockSpec((None, blk, Hd), lambda bi, qi: (bi, qi, 0))
    w_spec = pl.BlockSpec((d_in, Hd), lambda bi, qi: (0, 0))

    q, k, v = pl.pallas_call(
        functools.partial(_qkv_proj_kernel, scale=scale),
        out_shape=(qkv_shape, qkv_shape, qkv_shape),
        grid=(b, nq),
        in_specs=[
            pl.BlockSpec((None, blk, d_in), lambda bi, qi: (bi, qi, 0)),
            w_spec, w_spec, w_spec,
        ],
        out_specs=(qkv_spec, qkv_spec, qkv_spec),
        compiler_params=pltpu.CompilerParams(
            dimension_semantics=("parallel", "parallel")),
    )(x_p, wq_s, wk_s, wv_s)

    # ---------------- Pass 2: flash causal attention ----------------------
    # VMEM budget: resident bf16 K+V (double-buffered) + Q/O blocks + f32
    # score / accumulator live values. Capped at 64 MiB (v7x per-TC VMEM).
    est = (2 * 2 * 2 * T_pad * dhp               # K,V bf16, double-buffered
           + 2 * 2 * blk * dhp                   # Q bf16, double-buffered
           + 2 * 4 * blk * dhp                   # O f32, double-buffered
           + 4 * blk * blk + 8 * blk * dhp)      # scores + softmax state (f32)
    vmem_limit = int(min(64 * 2 ** 20, max(32 * 2 ** 20, 4 * est)))

    o = pl.pallas_call(
        functools.partial(_flash_causal_kernel, blk=blk),
        out_shape=jax.ShapeDtypeStruct((b, T_pad, Hd), x.dtype),
        grid=(b, H, nq),
        in_specs=[
            pl.BlockSpec((None, blk, dhp), lambda bi, hi, qi: (bi, qi, hi)),    # Q tile
            pl.BlockSpec((None, T_pad, dhp), lambda bi, hi, qi: (bi, 0, hi)),   # K resident
            pl.BlockSpec((None, T_pad, dhp), lambda bi, hi, qi: (bi, 0, hi)),   # V resident
        ],
        out_specs=pl.BlockSpec((None, blk, dhp), lambda bi, hi, qi: (bi, qi, hi)),
        compiler_params=pltpu.CompilerParams(
            dimension_semantics=("parallel", "parallel", "parallel"),
            vmem_limit_bytes=vmem_limit),
    )(q, k, v)

    # Output is already in (b, T_pad, H*dhp) "concatenated heads" layout; just
    # strip the sequence / head-dim padding.
    if dhp == d_head:
        return o[:, :T, :]
    o = o[:, :T].reshape(b, T, H, dhp)[..., :d_head]
    return o.reshape(b, T, H * d_head)


# --------------------------------------------------------------------------
# Pure-JAX reference mirroring MultiHeadAttnWrapper.forward (dropout p=0.0).
# --------------------------------------------------------------------------
def multi_head_attn_wrapper_ref(x, w_query, w_key, w_value):
    T = x.shape[1]
    mask = jnp.triu(jnp.ones((T, T), dtype=bool), k=1)

    def head(wq, wk, wv):
        q = x @ wq
        k = x @ wk
        v = x @ wv
        s = jnp.einsum("btd,bsd->bts", q, k)
        s = jnp.where(mask[None, :, :], -jnp.inf, s)
        w = jax.nn.softmax(s / (k.shape[-1] ** 0.5), axis=-1)
        return w @ v

    outs = [head(w_query[h], w_key[h], w_value[h]) for h in range(w_query.shape[0])]
    return jnp.concatenate(outs, axis=-1)


if __name__ == "__main__":
    # Shapes implied by the original script:
    #   inputs (6, 3) -> batch = stack(inputs, inputs) -> (2, 6, 3)
    #   MultiHeadAttnWrapper(d_in=3, d_out=2, context_length=6, dropout=0.0, num_heads=2)
    D_IN, D_HEAD, NUM_HEADS = 3, 2, 2
    inputs = jnp.array(
        [[0.43, 0.15, 0.89],
         [0.55, 0.87, 0.66],
         [0.57, 0.85, 0.64],
         [0.22, 0.58, 0.33],
         [0.77, 0.25, 0.10],
         [0.05, 0.80, 0.55]], dtype=jnp.float32)
    batch = jnp.stack([inputs, inputs], axis=0)        # (2, 6, 3)

    # Deterministic per-head weights (nn.Linear weights stored transposed,
    # qkv_bias=False): shape (num_heads, d_in, d_head).
    key = jax.random.PRNGKey(0)
    kq, kk, kv = jax.random.split(key, 3)
    w_query = jax.random.uniform(kq, (NUM_HEADS, D_IN, D_HEAD), dtype=jnp.float32)
    w_key = jax.random.uniform(kk, (NUM_HEADS, D_IN, D_HEAD), dtype=jnp.float32)
    w_value = jax.random.uniform(kv, (NUM_HEADS, D_IN, D_HEAD), dtype=jnp.float32)

    out = multi_head_attn_wrapper(batch, w_query, w_key, w_value)
    out = jax.block_until_ready(out)

    ref = multi_head_attn_wrapper_ref(batch, w_query, w_key, w_value)
    assert out.shape == (2, 6, NUM_HEADS * D_HEAD), out.shape
    # Tolerance accounts for bf16 Q/K/V intermediates + EUP approx reciprocal.
    assert jnp.allclose(out, ref, atol=2e-2, rtol=2e-2), "mismatch vs reference"

    print("KERNEL_OK")
</pallas_src>

<mosaic_0001>
module attributes {stable_mosaic.version = 11 : i64} {
  func.func @_qkv_proj_kernel(%arg0: i32, %arg1: i32, %arg2: memref<1x8x3xf32, #tpu.memory_space<vmem>>, %arg3: memref<3x256xbf16, #tpu.memory_space<vmem>>, %arg4: memref<3x256xbf16, #tpu.memory_space<vmem>>, %arg5: memref<3x256xbf16, #tpu.memory_space<vmem>>, %arg6: memref<1x8x256xbf16, #tpu.memory_space<vmem>>, %arg7: memref<1x8x256xbf16, #tpu.memory_space<vmem>>, %arg8: memref<1x8x256xbf16, #tpu.memory_space<vmem>>) attributes {dimension_semantics = [#tpu.dimension_semantics<parallel>, #tpu.dimension_semantics<parallel>], iteration_bounds = array<i64: 2, 1>, scalar_prefetch = 0 : i64, scratch_operands = 0 : i64, tpu.core_type = #tpu.core_type<tc>, window_params = [{transform_indices = @transform_0, window_bounds = array<i64: 1, 8, 3>}, {pipeline_mode = #tpu.pipeline_mode<synchronous>, transform_indices = @transform_1, window_bounds = array<i64: 3, 256>}, {pipeline_mode = #tpu.pipeline_mode<synchronous>, transform_indices = @transform_2, window_bounds = array<i64: 3, 256>}, {pipeline_mode = #tpu.pipeline_mode<synchronous>, transform_indices = @transform_3, window_bounds = array<i64: 3, 256>}, {transform_indices = @transform_4, window_bounds = array<i64: 1, 8, 256>}, {transform_indices = @transform_5, window_bounds = array<i64: 1, 8, 256>}, {transform_indices = @transform_6, window_bounds = array<i64: 1, 8, 256>}]} {
    %c0 = arith.constant 0 : index
    %c0_0 = arith.constant 0 : index
    %c0_1 = arith.constant 0 : index
    %0 = vector.load %arg2[%c0, %c0_0, %c0_1] : memref<1x8x3xf32, #tpu.memory_space<vmem>>, vector<1x8x3xf32>
    %1 = vector.shape_cast %0 : vector<1x8x3xf32> to vector<8x3xf32>
    %2 = arith.truncf %1 : vector<8x3xf32> to vector<8x3xbf16>
    %c0_2 = arith.constant 0 : index
    %c0_3 = arith.constant 0 : index
    %3 = vector.load %arg3[%c0_2, %c0_3] : memref<3x256xbf16, #tpu.memory_space<vmem>>, vector<3x256xbf16>
    %cst = arith.constant dense<0.000000e+00> : vector<8x256xf32>
    %4 = tpu.matmul %2, %3, %cst {dimension_numbers = #tpu.dot_dimension_numbers<[1], [0], [0], [1], [0, 0, 1, 1], [], []>} : vector<8x3xbf16>, vector<3x256xbf16>, vector<8x256xf32> -> vector<8x256xf32>
    %cst_4 = arith.constant 0.707106769 : f32
    %5 = vector.broadcast %cst_4 : f32 to vector<8x256xf32>
    %6 = arith.mulf %4, %5 : vector<8x256xf32>
    %c0_5 = arith.constant 0 : index
    %c0_6 = arith.constant 0 : index
    %7 = vector.load %arg4[%c0_5, %c0_6] : memref<3x256xbf16, #tpu.memory_space<vmem>>, vector<3x256xbf16>
    %cst_7 = arith.constant dense<0.000000e+00> : vector<8x256xf32>
    %8 = tpu.matmul %2, %7, %cst_7 {dimension_numbers = #tpu.dot_dimension_numbers<[1], [0], [0], [1], [0, 0, 1, 1], [], []>} : vector<8x3xbf16>, vector<3x256xbf16>, vector<8x256xf32> -> vector<8x256xf32>
    %c0_8 = arith.constant 0 : index
    %c0_9 = arith.constant 0 : index
    %9 = vector.load %arg5[%c0_8, %c0_9] : memref<3x256xbf16, #tpu.memory_space<vmem>>, vector<3x256xbf16>
    %cst_10 = arith.constant dense<0.000000e+00> : vector<8x256xf32>
    %10 = tpu.matmul %2, %9, %cst_10 {dimension_numbers = #tpu.dot_dimension_numbers<[1], [0], [0], [1], [0, 0, 1, 1], [], []>} : vector<8x3xbf16>, vector<3x256xbf16>, vector<8x256xf32> -> vector<8x256xf32>
    %11 = arith.truncf %6 : vector<8x256xf32> to vector<8x256xbf16>
    %c0_11 = arith.constant 0 : index
    %c0_12 = arith.constant 0 : index
    %c0_13 = arith.constant 0 : index
    %12 = vector.load %arg6[%c0_11, %c0_12, %c0_13] : memref<1x8x256xbf16, #tpu.memory_space<vmem>>, vector<1x8x256xbf16>
    %13 = vector.shape_cast %12 : vector<1x8x256xbf16> to vector<8x256xbf16>
    %14 = vector.shape_cast %11 : vector<8x256xbf16> to vector<1x8x256xbf16>
    tpu.vector_store %arg6[%c0_11, %c0_12, %c0_13], %14 {strides = array<i32>} : memref<1x8x256xbf16, #tpu.memory_space<vmem>>, vector<1x8x256xbf16>,
    %15 = arith.truncf %8 : vector<8x256xf32> to vector<8x256xbf16>
    %c0_14 = arith.constant 0 : index
    %c0_15 = arith.constant 0 : index
    %c0_16 = arith.constant 0 : index
    %16 = vector.load %arg7[%c0_14, %c0_15, %c0_16] : memref<1x8x256xbf16, #tpu.memory_space<vmem>>, vector<1x8x256xbf16>
    %17 = vector.shape_cast %16 : vector<1x8x256xbf16> to vector<8x256xbf16>
    %18 = vector.shape_cast %15 : vector<8x256xbf16> to vector<1x8x256xbf16>
    tpu.vector_store %arg7[%c0_14, %c0_15, %c0_16], %18 {strides = array<i32>} : memref<1x8x256xbf16, #tpu.memory_space<vmem>>, vector<1x8x256xbf16>,
    %19 = arith.truncf %10 : vector<8x256xf32> to vector<8x256xbf16>
    %c0_17 = arith.constant 0 : index
    %c0_18 = arith.constant 0 : index
    %c0_19 = arith.constant 0 : index
    %20 = vector.load %arg8[%c0_17, %c0_18, %c0_19] : memref<1x8x256xbf16, #tpu.memory_space<vmem>>, vector<1x8x256xbf16>
    %21 = vector.shape_cast %20 : vector<1x8x256xbf16> to vector<8x256xbf16>
    %22 = vector.shape_cast %19 : vector<8x256xbf16> to vector<1x8x256xbf16>
    tpu.vector_store %arg8[%c0_17, %c0_18, %c0_19], %22 {strides = array<i32>} : memref<1x8x256xbf16, #tpu.memory_space<vmem>>, vector<1x8x256xbf16>,
    return
  }
  func.func @transform_0(%arg0: i32, %arg1: i32) -> (i32, i32, i32) {
    %c0_i32 = arith.constant 0 : i32
    %c0_i32_0 = arith.constant 0 : i32
    return %arg0, %arg1, %c0_i32 : i32, i32, i32
  }
  func.func @transform_1(%arg0: i32, %arg1: i32) -> (i32, i32) {
    %c0_i32 = arith.constant 0 : i32
    %c0_i32_0 = arith.constant 0 : i32
    %c0_i32_1 = arith.constant 0 : i32
    return %c0_i32, %c0_i32_0 : i32, i32
  }
  func.func @transform_2(%arg0: i32, %arg1: i32) -> (i32, i32) {
    %c0_i32 = arith.constant 0 : i32
    %c0_i32_0 = arith.constant 0 : i32
    %c0_i32_1 = arith.constant 0 : i32
    return %c0_i32, %c0_i32_0 : i32, i32
  }
  func.func @transform_3(%arg0: i32, %arg1: i32) -> (i32, i32) {
    %c0_i32 = arith.constant 0 : i32
    %c0_i32_0 = arith.constant 0 : i32
    %c0_i32_1 = arith.constant 0 : i32
    return %c0_i32, %c0_i32_0 : i32, i32
  }
  func.func @transform_4(%arg0: i32, %arg1: i32) -> (i32, i32, i32) {
    %c0_i32 = arith.constant 0 : i32
    %c0_i32_0 = arith.constant 0 : i32
    return %arg0, %arg1, %c0_i32 : i32, i32, i32
  }
  func.func @transform_5(%arg0: i32, %arg1: i32) -> (i32, i32, i32) {
    %c0_i32 = arith.constant 0 : i32
    %c0_i32_0 = arith.constant 0 : i32
    return %arg0, %arg1, %c0_i32 : i32, i32, i32
  }
  func.func @transform_6(%arg0: i32, %arg1: i32) -> (i32, i32, i32) {
    %c0_i32 = arith.constant 0 : i32
    %c0_i32_0 = arith.constant 0 : i32
    return %arg0, %arg1, %c0_i32 : i32, i32, i32
  }
}

</mosaic_0001>

<llo_original>
// kernel: tpu_custom_call.1
$region0: #{tpu_custom_call.1}
  #allocation0 [shape = 'u32[]', space=smem, size = 0x4, offset = 0x4, fixed_abs, tag = 'smem constant byte address 0x4 - core index']
  #allocation1 [shape = 'u32[144,128]{1,0:T(1,128)}', space=vmem, size = 0x12000, scoped, tag = 'internal scratch']
  %s0 = inlined_call_operand.vmem [shape: f32[2,8,3], index: 0, kind: input, shape index: {}]
  %s1 = inlined_call_operand.vmem [shape: bf16[3,256], index: 1, kind: input, shape index: {}]
  %s2 = inlined_call_operand.vmem [shape: bf16[3,256], index: 2, kind: input, shape index: {}]
  %s3 = inlined_call_operand.vmem [shape: bf16[3,256], index: 3, kind: input, shape index: {}]
  %s4 = inlined_call_operand.hbm [shape: bf16[2,8,256], index: 4, kind: output, shape index: {0}]
  %s5 = inlined_call_operand.hbm [shape: bf16[2,8,256], index: 5, kind: output, shape index: {1}]
  %s6 = inlined_call_operand.hbm [shape: bf16[2,8,256], index: 6, kind: output, shape index: {2}]
  %7 = xla_tuple %s4, %s5, %s6
  %s8 = sld [smem:[#allocation0]]
  $region65: #{tpu_custom_call.1} parent=0
    _
  %s10 = ssub.s32 1, %s8
  %s11 = scalar_select 0, %s10, %s8
  $region1: #{tpu_custom_call.1} parent=0
    #allocation2 [shape = 'u8[8192]{0}', space=vmem, size = 0x2000, scoped, tag = 'output window, operand 0']
    #allocation3 [shape = 's32[2]{0}', space=sflag, size = 0x8, scoped, tag = 'scoped memory for tpu_custom_call.1']
    #allocation4 [shape = 'u8[8192]{0}', space=vmem, size = 0x2000, scoped, tag = 'output window, operand 1']
    #allocation5 [shape = 's32[2]{0}', space=sflag, size = 0x8, scoped, tag = 'scoped memory for tpu_custom_call.1']
    #allocation6 [shape = 'u8[8192]{0}', space=vmem, size = 0x2000, scoped, tag = 'output window, operand 2']
    %12 = vsyncpa [#allocation3], 0
    %s13 = scalar_lea.sflag [#allocation3], 1
    %14 = vsyncpa %s13, 0
    %15 = vsyncpa [#allocation5], 0
    %s16 = scalar_lea.sflag [#allocation5], 1
    %17 = vsyncpa %s16, 0
    loop: start=0, step=1, limit=4
    $region2: #{tpu_custom_call.1} parent=1 // loop_pre_header
      _
    $region3: #{tpu_custom_call.1} parent=1 // loop_header
      %s19 = sphi 0, %s23
      %p20 = scmp.ge.s32.totalorder %s19, 4
      %s26 = sphi 0, %s38
      %s27 = sphi 0, %s34
      %s28 = sphi 0, %s26
      %s29 = sphi 0, %s27
      %s30 = sphi 0, %s28
      %s31 = sphi 0, %s29
      %s43 = sphi 0, %s45
      %s46 = sphi 0, %s43
      %s47 = sphi 0, %s46
      %s63 = sphi 0, %s47
      %s67 = sphi 0, %s67
      %s69 = sphi 0, %s67
      %s70 = sphi 0, %s69
      %s84 = sphi 0, %s70
      %s88 = sphi 0, %s88
      %s90 = sphi 0, %s88
      %s91 = sphi 0, %s90
      %s105 = sphi 0, %s91
      %s109 = sphi 0, %s109
      %s111 = sphi 0, %s109
      %s112 = sphi 0, %s111
      %s126 = sphi 0, %s112
      %s134 = sphi 0, %s136
      %s137 = sphi 0, %s134
      %s138 = sphi 0, %s137
      %s154 = sphi 0, %s138
      %s162 = sphi 0, %s164
      %s165 = sphi 0, %s162
      %s166 = sphi 0, %s165
      %s182 = sphi 0, %s166
      %s190 = sphi 0, %s192
      %s193 = sphi 0, %s190
      %s194 = sphi 0, %s193
      %s210 = sphi 0, %s194
    $region4: #{tpu_custom_call.1} parent=1 // loop_header_branch
      %22 = sbr.rel (%p20) target = $region8
    $region5: #{tpu_custom_call.1} parent=1 // loop_body
      %s24 = ssub.s32 %s19, 1
      %s25 = ssub.s32 %s19, 2
      %s32 = sadd.s32 1, %s27
      %p33 = scmp.ge.s32.totalorder %s32, 1
      %s34 = scalar_select %p33, 0, %s32
      %s35 = sadd.s32 1, %s26
      %s36 = scalar_select %p33, %s35, %s26
      %p37 = scmp.ge.s32.totalorder %s36, 2
      %s38 = scalar_select %p37, 0, %s36
      %s39 = ssub.s32 %s26, %s38
      %s40 = ssub.s32 %s27, %s34
      %s41 = sor.u32 %s39, %s40
      %p42 = scmp.eq.s32.totalorder %s41, 0
      %s44 = sadd.s32 %s43, 1
      %s45 = scalar_select %p42, %s43, %s44
      %p48 = pneg %p42
      %p49 = scmp.eq.s32.totalorder %s19, 1
      %p50 = por %p48, %p49
      %p51 = scmp.ne.s32.totalorder %s43, %s46
      %p52 = scmp.eq.s32.totalorder %s19, 0
      %p53 = por %p51, %p52
      %p54 = scmp.ne.s32.totalorder %s43, %s46
      %p55 = scmp.eq.s32.totalorder %s24, 1
      %p56 = por %p54, %p55
      %p57 = scmp.ne.s32.totalorder %s46, %s47
      %p58 = scmp.eq.s32.totalorder %s24, 0
      %p59 = por %p57, %p58
      %p60 = scmp.ne.s32.totalorder %s46, %s47
      %p61 = scmp.eq.s32.totalorder %s25, 1
      %p62 = por %p60, %p61
      %p64 = scmp.ne.s32.totalorder %s47, %s63
      %p65 = scmp.eq.s32.totalorder %s25, 0
      %p66 = por %p64, %p65
      %s68 = sadd.s32 %s67, 1
      %p71 = scmp.eq.s32.totalorder %s19, 1
      %p72 = scmp.ne.s32.totalorder %s67, %s69
      %p73 = scmp.eq.s32.totalorder %s19, 0
      %p74 = por %p72, %p73
      %p75 = scmp.ne.s32.totalorder %s67, %s69
      %p76 = scmp.eq.s32.totalorder %s24, 1
      %p77 = por %p75, %p76
      %p78 = scmp.ne.s32.totalorder %s69, %s70
      %p79 = scmp.eq.s32.totalorder %s24, 0
      %p80 = por %p78, %p79
      %p81 = scmp.ne.s32.totalorder %s69, %s70
      %p82 = scmp.eq.s32.totalorder %s25, 1
      %p83 = por %p81, %p82
      %p85 = scmp.ne.s32.totalorder %s70, %s84
      %p86 = scmp.eq.s32.totalorder %s25, 0
      %p87 = por %p85, %p86
      %s89 = sadd.s32 %s88, 1
      %p92 = scmp.eq.s32.totalorder %s19, 1
      %p93 = scmp.ne.s32.totalorder %s88, %s90
      %p94 = scmp.eq.s32.totalorder %s19, 0
      %p95 = por %p93, %p94
      %p96 = scmp.ne.s32.totalorder %s88, %s90
      %p97 = scmp.eq.s32.totalorder %s24, 1
      %p98 = por %p96, %p97
      %p99 = scmp.ne.s32.totalorder %s90, %s91
      %p100 = scmp.eq.s32.totalorder %s24, 0
      %p101 = por %p99, %p100
      %p102 = scmp.ne.s32.totalorder %s90, %s91
      %p103 = scmp.eq.s32.totalorder %s25, 1
      %p104 = por %p102, %p103
      %p106 = scmp.ne.s32.totalorder %s91, %s105
      %p107 = scmp.eq.s32.totalorder %s25, 0
      %p108 = por %p106, %p107
      %s110 = sadd.s32 %s109, 1
      %p113 = scmp.eq.s32.totalorder %s19, 1
      %p114 = scmp.ne.s32.totalorder %s109, %s111
      %p115 = scmp.eq.s32.totalorder %s19, 0
      %p116 = por %p114, %p115
      %p117 = scmp.ne.s32.totalorder %s109, %s111
      %p118 = scmp.eq.s32.totalorder %s24, 1
      %p119 = por %p117, %p118
      %p120 = scmp.ne.s32.totalorder %s111, %s112
      %p121 = scmp.eq.s32.totalorder %s24, 0
      %p122 = por %p120, %p121
      %p123 = scmp.ne.s32.totalorder %s111, %s112
      %p124 = scmp.eq.s32.totalorder %s25, 1
      %p125 = por %p123, %p124
      %p127 = scmp.ne.s32.totalorder %s112, %s126
      %p128 = scmp.eq.s32.totalorder %s25, 0
      %p129 = por %p127, %p128
      %s130 = ssub.s32 %s26, %s38
      %s131 = ssub.s32 %s27, %s34
      %s132 = sor.u32 %s130, %s131
      %p133 = scmp.eq.s32.totalorder %s132, 0
      %s135 = sadd.s32 %s134, 1
      %s136 = scalar_select %p133, %s134, %s135
      %p139 = pneg %p133
      %p140 = scmp.eq.s32.totalorder %s19, 1
      %p141 = por %p139, %p140
      %p142 = scmp.ne.s32.totalorder %s134, %s137
      %p143 = scmp.eq.s32.totalorder %s19, 0
      %p144 = por %p142, %p143
      %p145 = scmp.ne.s32.totalorder %s134, %s137
      %p146 = scmp.eq.s32.totalorder %s24, 1
      %p147 = por %p145, %p146
      %p148 = scmp.ne.s32.totalorder %s137, %s138
      %p149 = scmp.eq.s32.totalorder %s24, 0
      %p150 = por %p148, %p149
      %p151 = scmp.ne.s32.totalorder %s137, %s138
      %p152 = scmp.eq.s32.totalorder %s25, 1
      %p153 = por %p151, %p152
      %p155 = scmp.ne.s32.totalorder %s138, %s154
      %p156 = scmp.eq.s32.totalorder %s25, 0
      %p157 = por %p155, %p156
      %s158 = ssub.s32 %s26, %s38
      %s159 = ssub.s32 %s27, %s34
      %s160 = sor.u32 %s158, %s159
      %p161 = scmp.eq.s32.totalorder %s160, 0
      %s163 = sadd.s32 %s162, 1
      %s164 = scalar_select %p161, %s162, %s163
      %p167 = pneg %p161
      %p168 = scmp.eq.s32.totalorder %s19, 1
      %p169 = por %p167, %p168
      %p170 = scmp.ne.s32.totalorder %s162, %s165
      %p171 = scmp.eq.s32.totalorder %s19, 0
      %p172 = por %p170, %p171
      %p173 = scmp.ne.s32.totalorder %s162, %s165
      %p174 = scmp.eq.s32.totalorder %s24, 1
      %p175 = por %p173, %p174
      %p176 = scmp.ne.s32.totalorder %s165, %s166
      %p177 = scmp.eq.s32.totalorder %s24, 0
      %p178 = por %p176, %p177
      %p179 = scmp.ne.s32.totalorder %s165, %s166
      %p180 = scmp.eq.s32.totalorder %s25, 1
      %p181 = por %p179, %p180
      %p183 = scmp.ne.s32.totalorder %s166, %s182
      %p184 = scmp.eq.s32.totalorder %s25, 0
      %p185 = por %p183, %p184
      %s186 = ssub.s32 %s26, %s38
      %s187 = ssub.s32 %s27, %s34
      %s188 = sor.u32 %s186, %s187
      %p189 = scmp.eq.s32.totalorder %s188, 0
      %s191 = sadd.s32 %s190, 1
      %s192 = scalar_select %p189, %s190, %s191
      %p195 = pneg %p189
      %p196 = scmp.eq.s32.totalorder %s19, 1
      %p197 = por %p195, %p196
      %p198 = scmp.ne.s32.totalorder %s190, %s193
      %p199 = scmp.eq.s32.totalorder %s19, 0
      %p200 = por %p198, %p199
      %p201 = scmp.ne.s32.totalorder %s190, %s193
      %p202 = scmp.eq.s32.totalorder %s24, 1
      %p203 = por %p201, %p202
      %p204 = scmp.ne.s32.totalorder %s193, %s194
      %p205 = scmp.eq.s32.totalorder %s24, 0
      %p206 = por %p204, %p205
      %p207 = scmp.ne.s32.totalorder %s193, %s194
      %p208 = scmp.eq.s32.totalorder %s25, 1
      %p209 = por %p207, %p208
      %p211 = scmp.ne.s32.totalorder %s194, %s210
      %p212 = scmp.eq.s32.totalorder %s25, 0
      %p213 = por %p211, %p212
      %p214 = scmp.le.s32.totalorder 1, %s19
      %p215 = scmp.lt.s32.totalorder %s19, 3
      %p216 = pnand %p214, %p215
      %p217 = pneg %p216
      // Predicated region
      $region9: #{tpu_custom_call.1} parent=5 // pred_check
        _
      $region10: #{tpu_custom_call.1} parent=5 // pred_check_branch
        %219 = sbr.rel (%p216) target = $region12
      $region11: #{tpu_custom_call.1} parent=5 // pred_region
        %s220 = ssub.s32 %s19, 1
        // Predicated region
        $region13: #{tpu_custom_call.1} parent=11 // pred_check
          %p221 = pneg %p80
        $region14: #{tpu_custom_call.1} parent=11 // pred_check_branch
          %223 = sbr.rel (%p221) target = $region16
        $region15: #{tpu_custom_call.1} parent=11 // pred_region
          _
        $region16: #{tpu_custom_call.1} parent=11 // pred_fallthru
          _
        // Predicated region
        $region17: #{tpu_custom_call.1} parent=11 // pred_check
          %p224 = pneg %p101
        $region18: #{tpu_custom_call.1} parent=11 // pred_check_branch
          %226 = sbr.rel (%p224) target = $region20
        $region19: #{tpu_custom_call.1} parent=11 // pred_region
          _
        $region20: #{tpu_custom_call.1} parent=11 // pred_fallthru
          _
        // Predicated region
        $region21: #{tpu_custom_call.1} parent=11 // pred_check
          %p227 = pneg %p122
        $region22: #{tpu_custom_call.1} parent=11 // pred_check_branch
          %229 = sbr.rel (%p227) target = $region24
        $region23: #{tpu_custom_call.1} parent=11 // pred_region
          _
        $region24: #{tpu_custom_call.1} parent=11 // pred_fallthru
          _
      $region12: #{tpu_custom_call.1} parent=5 // pred_fallthru
        _
      %p230 = scmp.lt.s32.totalorder %s19, 2
      // Predicated region
      $region25: #{tpu_custom_call.1} parent=5 // pred_check
        %p231 = pneg %p230
      $region26: #{tpu_custom_call.1} parent=5 // pred_check_branch
        %233 = sbr.rel (%p231) target = $region28
      $region27: #{tpu_custom_call.1} parent=5 // pred_region
        // Predicated region
        $region29: #{tpu_custom_call.1} parent=27 // pred_check
          %p234 = pneg %p53
        $region30: #{tpu_custom_call.1} parent=27 // pred_check_branch
          %236 = sbr.rel (%p234) target = $region32
        $region31: #{tpu_custom_call.1} parent=27 // pred_region
          %p237 = scmp.lt.s32.totalorder %s26, 1
          %s238 = scalar_select %p237, %s26, 1
          %p239 = scmp.lt.s32.totalorder %s27, 0
          %s240 = scalar_select %p239, %s27, 0
          %s241 = sadd.s32 %s240, %s238
          %s242 = smul.addr %s241, 8
          %s243 = scalar_lea.vmem %s0, %s242
        $region32: #{tpu_custom_call.1} parent=27 // pred_fallthru
          _
      $region28: #{tpu_custom_call.1} parent=5 // pred_fallthru
        _
      %p244 = scmp.le.s32.totalorder 1, %s19
      %p245 = scmp.lt.s32.totalorder %s19, 3
      %p246 = pnand %p244, %p245
      %p247 = pneg %p246
      // Predicated region
      $region33: #{tpu_custom_call.1} parent=5 // pred_check
        _
      $region34: #{tpu_custom_call.1} parent=5 // pred_check_branch
        %249 = sbr.rel (%p246) target = $region36
      $region35: #{tpu_custom_call.1} parent=5 // pred_region
        %s250 = ssub.s32 %s19, 1
        %p251 = scmp.lt.s32.totalorder %s28, 1
        %s252 = scalar_select %p251, %s28, 1
        %p253 = scmp.lt.s32.totalorder %s29, 0
        %s254 = scalar_select %p253, %s29, 0
        %s255 = sadd.s32 %s254, %s252
        %s256 = smul.addr %s255, 8
        %s257 = scalar_lea.vmem %s0, %s256
        %p258 = pneg %p59
        %p259 = pneg %p56
        %p260 = pneg %p80
        %p261 = pneg %p77
        %p262 = pneg %p101
        %p263 = pneg %p98
        %p264 = pneg %p122
        %p265 = pneg %p119
        %p266 = pneg %p150
        %p267 = pneg %p147
        %s268 = sand.u32 %s137, 1
        %s269 = scalar_lea.sflag [#allocation3], %s268
        %s270 = sand.u32 %s137, 1
        %s271 = smul.addr %s270, 8
        %s272 = scalar_lea.vmem [#allocation2], %s271
        %p273 = pneg %p178
        %p274 = pneg %p175
        %s275 = sand.u32 %s24, 1
        %s276 = scalar_lea.sflag [#allocation5], %s275
        %s277 = sand.u32 %s165, 1
        %s278 = smul.addr %s277, 8
        %s279 = scalar_lea.vmem [#allocation4], %s278
        %p280 = pneg %p206
        %p281 = pneg %p203
        %s282 = sand.u32 %s24, 1
        %s283 = scalar_lea.sflag [#allocation5], %s282
        %s284 = sand.u32 %s193, 1
        %s285 = smul.addr %s284, 8
        %s286 = scalar_lea.vmem [#allocation6], %s285
        %p287 = scmp.lt.s32.totalorder %s28, 1
        %s288 = scalar_select %p287, %s28, 1
        %p289 = scmp.lt.s32.totalorder %s29, 0
        %s290 = scalar_select %p289, %s29, 0
        %s291 = sadd.s32 %s290, %s288
        %s292 = smul.addr %s291, 8
        %s293 = scalar_lea.vmem %s0, %s292
        %v295 = vld [vmem:[%s293] sm:$0xff]
        %v296 = vpack.c.bf16 %v295, %v295
        %v297 = vld [vmem:[%s1] sm:$0xf]
        %v300 = vunpack.c.l.s4 1983009808
        %v301 = vunpack.c.0.s8 %v300
        %v302 = vlaneseq
        %v303 = vshrl.u32 %v302, 7
        %v304 = vsub.s32 %v301, %v303
        %v305 = vrot.slane %v297, %v304
        %v306 = vcombine.high %v305, %v305
        %vm307 = vcmask 23552
        %v309 = vsel %vm307, %v296, 0
        %vm311 = vcmask 1040384
        %vm312 = vcmask 1041408
        %v313 = vsel %vm311, 4294967295, 65535
        %v314 = vsel %vm312, %v313, 0
        %v316 = vand.u32 %v305, %v314
        %v319 = vand.u32 %v306, %v314
        %321 = vmatprep.subr.bf16.mxu0 0
        %322 = vmatpush1.bf16.msra.mxu0 0
        %323 = vmatprep.subr.bf16.mxu0 0
        %324 = vmatpush1.bf16.msra.mxu0 0
        %325 = vmatprep.subr.bf16.mxu0 0
        %326 = vmatpush1.bf16.msra.mxu0 0
        %327 = vmatprep.subr.bf16.mxu0 0
        %328 = vmatpush1.bf16.msra.mxu0 0
        %329 = vmatprep.subr.bf16.mxu0 0
        %330 = vmatpush1.bf16.msra.mxu0 0
        %331 = vmatprep.subr.bf16.mxu0 0
        %332 = vmatpush1.bf16.msra.mxu0 0
        %333 = vmatprep.subr.bf16.mxu0 0
        %334 = vmatpush1.bf16.msra.mxu0 0
        %335 = vmatprep.subr.bf16.mxu0 %v319
        %336 = vmatpush1.bf16.msra.mxu0 %v316
        %337 = vmatprep.subr.bf16.mxu0 0
        %338 = vmatpush2.bf16.msra.mxu0 0
        %339 = vmatprep.subr.bf16.mxu0 0
        %340 = vmatpush2.bf16.msra.mxu0 0
        %341 = vmatprep.subr.bf16.mxu0 0
        %342 = vmatpush2.bf16.msra.mxu0 0
        %343 = vmatprep.subr.bf16.mxu0 0
        %344 = vmatpush2.bf16.msra.mxu0 0
        %345 = vmatprep.subr.bf16.mxu0 0
        %346 = vmatpush2.bf16.msra.mxu0 0
        %347 = vmatprep.subr.bf16.mxu0 0
        %348 = vmatpush2.bf16.msra.mxu0 0
        %349 = vmatprep.subr.bf16.mxu0 0
        %350 = vmatpush2.bf16.msra.mxu0 0
        %351 = vmatprep.subr.bf16.mxu0 0
        %352 = vmatpush2.bf16.msra.mxu0 0
        %353 = vmatprep.mubr.bf16.mxu0 0
        %354 = vmatmul.mubr.bf16.gmra.mxu0 %v309
        %v355 = vpop.f32.mrf.mxu0
        %v356 = vadd.f32 0.0, %v355
        %v357 = vpop.f32.mrf.mxu0
        %v358 = vadd.f32 0.0, %v357
        %v359 = vpop.f32.mrf.mxu0
        %v360 = vpop.f32.mrf.mxu0
        %361 = vdwg.mxu0
        %v362 = vmul.f32 %v356, 0.70710677
        %v363 = vmul.f32 %v358, 0.70710677
        %v364 = vld [vmem:[%s2] sm:$0xf]
        %v367 = vunpack.c.l.s4 1983009808
        %v368 = vunpack.c.0.s8 %v367
        %v369 = vlaneseq
        %v370 = vshrl.u32 %v369, 7
        %v371 = vsub.s32 %v368, %v370
        %v372 = vrot.slane %v364, %v371
        %v373 = vcombine.high %v372, %v372
        %v375 = vand.u32 %v372, %v314
        %v378 = vand.u32 %v373, %v314
        %380 = vmatprep.subr.bf16.mxu0 0
        %381 = vmatpush1.bf16.msra.mxu0 0
        %382 = vmatprep.subr.bf16.mxu0 0
        %383 = vmatpush1.bf16.msra.mxu0 0
        %384 = vmatprep.subr.bf16.mxu0 0
        %385 = vmatpush1.bf16.msra.mxu0 0
        %386 = vmatprep.subr.bf16.mxu0 0
        %387 = vmatpush1.bf16.msra.mxu0 0
        %388 = vmatprep.subr.bf16.mxu0 0
        %389 = vmatpush1.bf16.msra.mxu0 0
        %390 = vmatprep.subr.bf16.mxu0 0
        %391 = vmatpush1.bf16.msra.mxu0 0
        %392 = vmatprep.subr.bf16.mxu0 0
        %393 = vmatpush1.bf16.msra.mxu0 0
        %394 = vmatprep.subr.bf16.mxu0 %v378
        %395 = vmatpush1.bf16.msra.mxu0 %v375
        %396 = vmatprep.subr.bf16.mxu0 0
        %397 = vmatpush2.bf16.msra.mxu0 0
        %398 = vmatprep.subr.bf16.mxu0 0
        %399 = vmatpush2.bf16.msra.mxu0 0
        %400 = vmatprep.subr.bf16.mxu0 0
        %401 = vmatpush2.bf16.msra.mxu0 0
        %402 = vmatprep.subr.bf16.mxu0 0
        %403 = vmatpush2.bf16.msra.mxu0 0
        %404 = vmatprep.subr.bf16.mxu0 0
        %405 = vmatpush2.bf16.msra.mxu0 0
        %406 = vmatprep.subr.bf16.mxu0 0
        %407 = vmatpush2.bf16.msra.mxu0 0
        %408 = vmatprep.subr.bf16.mxu0 0
        %409 = vmatpush2.bf16.msra.mxu0 0
        %410 = vmatprep.subr.bf16.mxu0 0
        %411 = vmatpush2.bf16.msra.mxu0 0
        %412 = vmatprep.mubr.bf16.mxu0 0
        %413 = vmatmul.mubr.bf16.gmra.mxu0 %v309
        %v414 = vpop.f32.mrf.mxu0
        %v415 = vadd.f32 0.0, %v414
        %v416 = vpop.f32.mrf.mxu0
        %v417 = vadd.f32 0.0, %v416
        %v418 = vpop.f32.mrf.mxu0
        %v419 = vpop.f32.mrf.mxu0
        %420 = vdwg.mxu0
        %v421 = vld [vmem:[%s3] sm:$0xf]
        %v424 = vunpack.c.l.s4 1983009808
        %v425 = vunpack.c.0.s8 %v424
        %v426 = vlaneseq
        %v427 = vshrl.u32 %v426, 7
        %v428 = vsub.s32 %v425, %v427
        %v429 = vrot.slane %v421, %v428
        %v430 = vcombine.high %v429, %v429
        %v432 = vand.u32 %v429, %v314
        %v435 = vand.u32 %v430, %v314
        %437 = vmatprep.subr.bf16.mxu0 0
        %438 = vmatpush1.bf16.msra.mxu0 0
        %439 = vmatprep.subr.bf16.mxu0 0
        %440 = vmatpush1.bf16.msra.mxu0 0
        %441 = vmatprep.subr.bf16.mxu0 0
        %442 = vmatpush1.bf16.msra.mxu0 0
        %443 = vmatprep.subr.bf16.mxu0 0
        %444 = vmatpush1.bf16.msra.mxu0 0
        %445 = vmatprep.subr.bf16.mxu0 0
        %446 = vmatpush1.bf16.msra.mxu0 0
        %447 = vmatprep.subr.bf16.mxu0 0
        %448 = vmatpush1.bf16.msra.mxu0 0
        %449 = vmatprep.subr.bf16.mxu0 0
        %450 = vmatpush1.bf16.msra.mxu0 0
        %451 = vmatprep.subr.bf16.mxu0 %v435
        %452 = vmatpush1.bf16.msra.mxu0 %v432
        %453 = vmatprep.subr.bf16.mxu0 0
        %454 = vmatpush2.bf16.msra.mxu0 0
        %455 = vmatprep.subr.bf16.mxu0 0
        %456 = vmatpush2.bf16.msra.mxu0 0
        %457 = vmatprep.subr.bf16.mxu0 0
        %458 = vmatpush2.bf16.msra.mxu0 0
        %459 = vmatprep.subr.bf16.mxu0 0
        %460 = vmatpush2.bf16.msra.mxu0 0
        %461 = vmatprep.subr.bf16.mxu0 0
        %462 = vmatpush2.bf16.msra.mxu0 0
        %463 = vmatprep.subr.bf16.mxu0 0
        %464 = vmatpush2.bf16.msra.mxu0 0
        %465 = vmatprep.subr.bf16.mxu0 0
        %466 = vmatpush2.bf16.msra.mxu0 0
        %467 = vmatprep.subr.bf16.mxu0 0
        %468 = vmatpush2.bf16.msra.mxu0 0
        %469 = vmatprep.mubr.bf16.mxu0 0
        %470 = vmatmul.mubr.bf16.gmra.mxu0 %v309
        %v471 = vpop.f32.mrf.mxu0
        %v472 = vadd.f32 0.0, %v471
        %v473 = vpop.f32.mrf.mxu0
        %v474 = vadd.f32 0.0, %v473
        %v475 = vpop.f32.mrf.mxu0
        %v476 = vpop.f32.mrf.mxu0
        %477 = vdwg.mxu0
        %v478 = vpack.c.bf16 %v362, %v362
        %v479 = vpack.c.bf16 %v363, %v363
        %v482 = vunpack.c.l.b16 %v478
        %v483 = vunpack.c.l.b16 %v479
        %v484 = vpack.c.b16 %v483, %v482
        %486 = vst [vmem:[%s272] sm:$0xff] %v484
        %v487 = vpack.c.bf16 %v415, %v415
        %v488 = vpack.c.bf16 %v417, %v417
        %v491 = vunpack.c.l.b16 %v487
        %v492 = vunpack.c.l.b16 %v488
        %v493 = vpack.c.b16 %v492, %v491
        %495 = vst [vmem:[%s279] sm:$0xff] %v493
        %v496 = vpack.c.bf16 %v472, %v472
        %v497 = vpack.c.bf16 %v474, %v474
        %v500 = vunpack.c.l.b16 %v496
        %v501 = vunpack.c.l.b16 %v497
        %v502 = vpack.c.b16 %v501, %v500
        %504 = vst [vmem:[%s286] sm:$0xff] %v502
        %s505 = sand.u32 %s137, 1
        %s506 = scalar_lea.sflag [#allocation3], %s505
        %s507 = sand.u32 %s137, 1
        %s508 = smul.addr %s507, 8
        %s509 = scalar_lea.vmem [#allocation2], %s508
        %s510 = sand.u32 %s24, 1
        %s511 = scalar_lea.sflag [#allocation5], %s510
        %s512 = sand.u32 %s165, 1
        %s513 = smul.addr %s512, 8
        %s514 = scalar_lea.vmem [#allocation4], %s513
        %s515 = sand.u32 %s24, 1
        %s516 = scalar_lea.sflag [#allocation5], %s515
        %s517 = sand.u32 %s193, 1
        %s518 = smul.addr %s517, 8
        %s519 = scalar_lea.vmem [#allocation6], %s518
        // Predicated region
        $region37: #{tpu_custom_call.1} parent=35 // pred_check
          %p520 = pneg %p147
        $region38: #{tpu_custom_call.1} parent=35 // pred_check_branch
          %522 = sbr.rel (%p520) target = $region40
        $region39: #{tpu_custom_call.1} parent=35 // pred_region
          %s524 = ssub.s32 128, 128
          %525 = vsyncadd %s506, %s524
          %s526 = smul.addr %s29, 2
          %s527 = smul.addr %s28, 2
          %s528 = sadd.s32 %s526, %s527
          %s529 = smul.addr %s528, 64
          %s530 = scalar_lea.hbm %s4, %s529
          %s532 = sshll.u32 %s509, 4
          %s533 = int_to_ptr.vmem [resolvable:$true] %s532
          %535 = dma.vmem_to_hbm [thread:$0]  %s533, 128, %s530, %s506
        $region40: #{tpu_custom_call.1} parent=35 // pred_fallthru
          _
        // Predicated region
        $region41: #{tpu_custom_call.1} parent=35 // pred_check
          %p536 = pneg %p175
        $region42: #{tpu_custom_call.1} parent=35 // pred_check_branch
          %538 = sbr.rel (%p536) target = $region44
        $region43: #{tpu_custom_call.1} parent=35 // pred_region
          %s540 = ssub.s32 128, 128
          %541 = vsyncadd %s511, %s540
          %s542 = smul.addr %s29, 2
          %s543 = smul.addr %s28, 2
          %s544 = sadd.s32 %s542, %s543
          %s545 = smul.addr %s544, 64
          %s546 = scalar_lea.hbm %s5, %s545
          %s548 = sshll.u32 %s514, 4
          %s549 = int_to_ptr.vmem [resolvable:$true] %s548
          %551 = dma.vmem_to_hbm [thread:$0]  %s549, 128, %s546, %s511
        $region44: #{tpu_custom_call.1} parent=35 // pred_fallthru
          _
        // Predicated region
        $region45: #{tpu_custom_call.1} parent=35 // pred_check
          %p552 = pneg %p203
        $region46: #{tpu_custom_call.1} parent=35 // pred_check_branch
          %554 = sbr.rel (%p552) target = $region48
        $region47: #{tpu_custom_call.1} parent=35 // pred_region
          %s556 = ssub.s32 128, 128
          %557 = vsyncadd %s516, %s556
          %s558 = smul.addr %s29, 2
          %s559 = smul.addr %s28, 2
          %s560 = sadd.s32 %s558, %s559
          %s561 = smul.addr %s560, 64
          %s562 = scalar_lea.hbm %s6, %s561
          %s564 = sshll.u32 %s519, 4
          %s565 = int_to_ptr.vmem [resolvable:$true] %s564
          %567 = dma.vmem_to_hbm [thread:$0]  %s565, 128, %s562, %s516
        $region48: #{tpu_custom_call.1} parent=35 // pred_fallthru
          _
      $region36: #{tpu_custom_call.1} parent=5 // pred_fallthru
        _
      %p568 = scmp.le.s32.totalorder 2, %s19
      // Predicated region
      $region49: #{tpu_custom_call.1} parent=5 // pred_check
        %p569 = pneg %p568
      $region50: #{tpu_custom_call.1} parent=5 // pred_check_branch
        %571 = sbr.rel (%p569) target = $region52
      $region51: #{tpu_custom_call.1} parent=5 // pred_region
        %s572 = ssub.s32 %s19, 2
        // Predicated region
        $region53: #{tpu_custom_call.1} parent=51 // pred_check
          %p573 = pneg %p153
        $region54: #{tpu_custom_call.1} parent=51 // pred_check_branch
          %575 = sbr.rel (%p573) target = $region56
        $region55: #{tpu_custom_call.1} parent=51 // pred_region
          %s576 = sand.u32 %s138, 1
          %s577 = scalar_lea.sflag [#allocation3], %s576
          %s578 = sand.u32 %s138, 1
          %s579 = smul.addr %s578, 8
          %s580 = scalar_lea.vmem [#allocation2], %s579
          %581 = dma.done %s577, 128
        $region56: #{tpu_custom_call.1} parent=51 // pred_fallthru
          _
        // Predicated region
        $region57: #{tpu_custom_call.1} parent=51 // pred_check
          %p582 = pneg %p181
        $region58: #{tpu_custom_call.1} parent=51 // pred_check_branch
          %584 = sbr.rel (%p582) target = $region60
        $region59: #{tpu_custom_call.1} parent=51 // pred_region
          %s585 = sand.u32 %s25, 1
          %s586 = scalar_lea.sflag [#allocation5], %s585
          %s587 = sand.u32 %s166, 1
          %s588 = smul.addr %s587, 8
          %s589 = scalar_lea.vmem [#allocation4], %s588
          %590 = dma.done %s586, 128
        $region60: #{tpu_custom_call.1} parent=51 // pred_fallthru
          _
        // Predicated region
        $region61: #{tpu_custom_call.1} parent=51 // pred_check
          %p591 = pneg %p209
        $region62: #{tpu_custom_call.1} parent=51 // pred_check_branch
          %593 = sbr.rel (%p591) target = $region64
        $region63: #{tpu_custom_call.1} parent=51 // pred_region
          %s594 = sand.u32 %s25, 1
          %s595 = scalar_lea.sflag [#allocation5], %s594
          %s596 = sand.u32 %s194, 1
          %s597 = smul.addr %s596, 8
          %s598 = scalar_lea.vmem [#allocation6], %s597
          %599 = dma.done %s595, 128
        $region64: #{tpu_custom_call.1} parent=51 // pred_fallthru
          _
      $region52: #{tpu_custom_call.1} parent=5 // pred_fallthru
        _
    $region6: #{tpu_custom_call.1} parent=1 // loop_footer
      %s23 = sadd.s32 1, %s19
    $region7: #{tpu_custom_call.1} parent=1 // loop_footer_branch
      %18 = sbr.rel target = $region3
    $region8: #{tpu_custom_call.1} parent=1 // loop_exit
      _
    %600 = vsyncpa [#allocation3], 1
    %s601 = scalar_lea.sflag [#allocation3], 1
    %602 = vsyncpa %s601, 1
    %603 = vsyncpa [#allocation5], 1
    %s604 = scalar_lea.sflag [#allocation5], 1
    %605 = vsyncpa %s604, 1

</llo_original>
